<compile_context>
chip_gen: v7x
topology: tpu7x:2x2x1
jax: 0.10.0
libtpu: 0.0.40
codegen_flags: <defaults>
</compile_context>

<pallas_src>
import functools
import math

import jax
import jax.numpy as jnp
from jax import lax
from jax.experimental import pallas as pl
from jax.experimental.pallas import tpu as pltpu


def _round_up(x, m):
    return ((x + m - 1) // m) * m


def _device_config():
    """(tq, tkv, vmem_cap_bytes), keyed on TPU generation with a safe default."""
    kind = ""
    try:
        kind = jax.devices()[0].device_kind.lower()
    except Exception:
        pass
    if "v6" in kind:                 # 128 MiB VMEM, 256x256 MXU -> bigger tiles
        return 512, 1024, 100 << 20
    if "v5" in kind or "v4" in kind:
        return 256, 512, 96 << 20
    # v7x (64 MiB VMEM per TensorCore) or unknown: stay conservative.
    return 256, 512, 48 << 20


# ---------------------------------------------------------------------------
# Linear (x @ W + b) kernel — used for the qkv and proj layers.
# ---------------------------------------------------------------------------
def _linear_bias_kernel(x_ref, w_ref, b_ref, o_ref, *, compute_dtype):
    x = x_ref[...].astype(compute_dtype)
    w = w_ref[...].astype(compute_dtype)
    acc = jnp.dot(x, w, preferred_element_type=jnp.float32)
    acc = acc + b_ref[...].astype(jnp.float32)
    o_ref[...] = acc.astype(o_ref.dtype)


def linear_pallas(x2, w, b, *, tm=256, tn_cap=1024, vmem_cap=48 << 20):
    """x2: (M, K), w: (K, N) (already W.T vs. PyTorch), b: (1, N)."""
    M, K = x2.shape
    N = w.shape[1]
    compute_dtype = jnp.bfloat16 if x2.dtype == jnp.float32 else x2.dtype

    tm = min(tm, _round_up(M, 8))
    Mp = _round_up(M, tm)
    xp = x2 if Mp == M else jnp.pad(x2, ((0, Mp - M), (0, 0)))

    if N % 128 == 0:
        tn = max(t for t in range(128, min(tn_cap, N) + 1, 128) if N % t == 0)
    else:
        tn = N  # full-extent block is always legal

    itemsize = jnp.dtype(x2.dtype).itemsize
    need = 2 * (tm * K + K * tn + tn + tm * tn) * itemsize
    vmem_limit = int(min(vmem_cap, max(need + (8 << 20), 32 << 20)))

    cost = pl.CostEstimate(
        flops=2 * Mp * K * N,
        transcendentals=0,
        bytes_accessed=int((Mp * K + K * N + N + Mp * N) * itemsize),
    )

    kernel = functools.partial(_linear_bias_kernel, compute_dtype=compute_dtype)

    out = pl.pallas_call(
        kernel,
        out_shape=jax.ShapeDtypeStruct((Mp, N), x2.dtype),
        grid_spec=pltpu.PrefetchScalarGridSpec(
            num_scalar_prefetch=0,
            grid=(Mp // tm, N // tn),
            in_specs=[
                pl.BlockSpec((tm, K), lambda i, j: (i, 0)),   # x row tile
                pl.BlockSpec((K, tn), lambda i, j: (0, j)),   # W column tile
                pl.BlockSpec((1, tn), lambda i, j: (0, j)),   # bias tile
            ],
            out_specs=pl.BlockSpec((tm, tn), lambda i, j: (i, j)),
        ),
        compiler_params=pltpu.CompilerParams(
            dimension_semantics=("parallel", "parallel"),
            vmem_limit_bytes=vmem_limit,
        ),
        cost_estimate=cost,
    )(xp, w, b)
    return out if Mp == M else out[:M]


# ---------------------------------------------------------------------------
# Flash-style attention core (all heads of a q tile per grid step).
# ---------------------------------------------------------------------------
def _flash_attn_kernel(*refs, scale, num_heads, head_dim, seq_len, tq, tkv,
                       with_bias, kh, kw, compute_dtype, need_mask):
    if with_bias:
        (q_ref, k_ref, v_ref, relh_ref, relw_ref, eh_ref, ew_ref,
         o_ref, m_sc, l_sc, acc_sc) = refs
    else:
        q_ref, k_ref, v_ref, o_ref, m_sc, l_sc, acc_sc = refs
        relh_ref = relw_ref = eh_ref = ew_ref = None

    j = pl.program_id(2)
    nkv = pl.num_programs(2)

    @pl.when(j == 0)
    def _init():
        m_sc[...] = jnp.full_like(m_sc, -jnp.inf)
        l_sc[...] = jnp.zeros_like(l_sc)
        acc_sc[...] = jnp.zeros_like(acc_sc)

    kv_mask = None
    if need_mask:
        col = j * tkv + lax.broadcasted_iota(jnp.int32, (tq, tkv), 1)
        kv_mask = col < seq_len

    if with_bias:
        eh = eh_ref[...]   # (kh, tkv), 0/1 in compute dtype
        ew = ew_ref[...]   # (kw, tkv)

    for h in range(num_heads):
        d0 = h * head_dim
        r0 = h * tq
        q_h = q_ref[0, :, d0:d0 + head_dim].astype(compute_dtype)
        k_h = k_ref[0, :, d0:d0 + head_dim].astype(compute_dtype)
        v_h = v_ref[0, :, d0:d0 + head_dim].astype(compute_dtype)

        # (tq, tkv) scores, contracting over head_dim (MXU, f32 accumulate).
        s = lax.dot_general(q_h, k_h, (((1,), (1,)), ((), ())),
                            preferred_element_type=jnp.float32) * scale
        if with_bias:
            rh = relh_ref[0, :, h * kh:(h + 1) * kh].astype(compute_dtype)
            rw = relw_ref[0, :, h * kw:(h + 1) * kw].astype(compute_dtype)
            # bias[q, key] = rel_h[q, key // k_w] + rel_w[q, key % k_w],
            # realized as two small matmuls against 0/1 expansion matrices.
            s = s + jnp.dot(rh, eh, preferred_element_type=jnp.float32)
            s = s + jnp.dot(rw, ew, preferred_element_type=jnp.float32)
        if kv_mask is not None:
            s = jnp.where(kv_mask, s, -1e30)

        m_prev = m_sc[r0:r0 + tq, :]
        l_prev = l_sc[r0:r0 + tq, :]
        m_new = jnp.maximum(m_prev, s.max(axis=-1, keepdims=True))
        alpha = jnp.exp(m_prev - m_new)
        p = jnp.exp(s - m_new)
        l_new = alpha * l_prev + p.sum(axis=-1, keepdims=True)
        acc_new = alpha * acc_sc[:, d0:d0 + head_dim] + jnp.dot(
            p.astype(compute_dtype), v_h, preferred_element_type=jnp.float32)
        m_sc[r0:r0 + tq, :] = m_new
        l_sc[r0:r0 + tq, :] = l_new
        acc_sc[:, d0:d0 + head_dim] = acc_new

    @pl.when(j == nkv - 1)
    def _finalize():
        parts = []
        for h in range(num_heads):
            d0 = h * head_dim
            r0 = h * tq
            inv_l = pl.reciprocal(l_sc[r0:r0 + tq, :], approx=True)
            parts.append((acc_sc[:, d0:d0 + head_dim] * inv_l).astype(o_ref.dtype))
        o_ref[0] = jnp.concatenate(parts, axis=-1) if num_heads > 1 else parts[0]


def flash_attention(qkv, *, num_heads, head_dim, seq_len, scale, tq, tkv,
                    vmem_cap, rel_h=None, rel_w=None, eh=None, ew=None):
    """qkv: (B, Sp, 3*dim), padded so that tq | Sp and tkv | Sp."""
    B, Sp, last = qkv.shape
    dim = num_heads * head_dim
    assert last == 3 * dim and Sp % tq == 0 and Sp % tkv == 0
    nq, nkv = Sp // tq, Sp // tkv
    with_bias = rel_h is not None
    need_mask = Sp != seq_len
    compute_dtype = jnp.bfloat16 if qkv.dtype == jnp.float32 else qkv.dtype
    itemsize = jnp.dtype(qkv.dtype).itemsize

    if dim % 128 == 0:
        # Zero-copy head split: q/k/v are last-dim chunks of the qkv array.
        inputs = [qkv, qkv, qkv]
        in_specs = [
            pl.BlockSpec((1, tq, dim), lambda b, i, j: (b, i, 0)),
            pl.BlockSpec((1, tkv, dim), lambda b, i, j: (b, j, 1)),
            pl.BlockSpec((1, tkv, dim), lambda b, i, j: (b, j, 2)),
        ]
    else:
        # TODO(synk): last-dim chunking needs dim % 128 == 0; fall back to
        # three plain-JAX slices (still no head transpose).
        q = lax.slice_in_dim(qkv, 0, dim, axis=2)
        k = lax.slice_in_dim(qkv, dim, 2 * dim, axis=2)
        v = lax.slice_in_dim(qkv, 2 * dim, 3 * dim, axis=2)
        inputs = [q, k, v]
        in_specs = [
            pl.BlockSpec((1, tq, dim), lambda b, i, j: (b, i, 0)),
            pl.BlockSpec((1, tkv, dim), lambda b, i, j: (b, j, 0)),
            pl.BlockSpec((1, tkv, dim), lambda b, i, j: (b, j, 0)),
        ]

    kh = kw = 0
    if with_bias:
        kh = rel_h.shape[-1] // num_heads
        kw = rel_w.shape[-1] // num_heads
        inputs += [rel_h, rel_w, eh, ew]
        in_specs += [
            pl.BlockSpec((1, tq, num_heads * kh), lambda b, i, j: (b, i, 0)),
            pl.BlockSpec((1, tq, num_heads * kw), lambda b, i, j: (b, i, 0)),
            pl.BlockSpec((kh, tkv), lambda b, i, j: (0, j)),
            pl.BlockSpec((kw, tkv), lambda b, i, j: (0, j)),
        ]

    need = 2 * (2 * tq * dim + 2 * tkv * dim) * itemsize     # q/out + k/v (x2 buf)
    need += tq * dim * 4 + 2 * num_heads * tq * 128 * 4      # scratch (lane-padded)
    if with_bias:
        need += 2 * tq * num_heads * (kh + kw) * itemsize
        need += 2 * (kh + kw) * tkv * jnp.dtype(compute_dtype).itemsize
    vmem_limit = int(min(vmem_cap, max(need + (16 << 20), 32 << 20)))

    flops = 4 * B * num_heads * Sp * Sp * head_dim
    if with_bias:
        flops += 2 * B * num_heads * Sp * Sp * (kh + kw)
    cost = pl.CostEstimate(
        flops=int(flops),
        transcendentals=int(B * num_heads * Sp * Sp),
        bytes_accessed=int(4 * B * Sp * dim * itemsize),
    )

    kernel = functools.partial(
        _flash_attn_kernel, scale=scale, num_heads=num_heads,
        head_dim=head_dim, seq_len=seq_len, tq=tq, tkv=tkv,
        with_bias=with_bias, kh=kh, kw=kw, compute_dtype=compute_dtype,
        need_mask=need_mask)

    return pl.pallas_call(
        kernel,
        out_shape=jax.ShapeDtypeStruct((B, Sp, dim), qkv.dtype),
        grid_spec=pltpu.PrefetchScalarGridSpec(
            num_scalar_prefetch=0,
            grid=(B, nq, nkv),
            in_specs=in_specs,
            out_specs=pl.BlockSpec((1, tq, dim), lambda b, i, j: (b, i, 0)),
            scratch_shapes=[
                pltpu.VMEM((num_heads * tq, 1), jnp.float32),   # running max m
                pltpu.VMEM((num_heads * tq, 1), jnp.float32),   # running denom l
                pltpu.VMEM((tq, dim), jnp.float32),             # output accumulator
            ],
        ),
        compiler_params=pltpu.CompilerParams(
            dimension_semantics=("parallel", "parallel", "arbitrary"),
            vmem_limit_bytes=vmem_limit,
        ),
        cost_estimate=cost,
    )(*inputs)


# ---------------------------------------------------------------------------
# Decomposed relative position tables (plain JAX; tiny gathers / einsums).
# ---------------------------------------------------------------------------
def _linear_resize_1d(rel_pos, new_len):
    # Equivalent of F.interpolate(..., mode='linear', align_corners=False).
    old_len = rel_pos.shape[0]
    pos = (jnp.arange(new_len, dtype=jnp.float32) + 0.5) * (old_len / new_len) - 0.5
    lo = jnp.clip(jnp.floor(pos), 0, old_len - 1).astype(jnp.int32)
    hi = jnp.clip(lo + 1, 0, old_len - 1)
    w = jnp.clip(pos - lo.astype(jnp.float32), 0.0, 1.0)[:, None]
    return rel_pos[lo] * (1.0 - w) + rel_pos[hi] * w


def get_rel_pos_jax(q_size, k_size, rel_pos):
    max_rel_dist = int(2 * max(q_size, k_size) - 1)
    if rel_pos.shape[0] != max_rel_dist:
        rel_pos = _linear_resize_1d(rel_pos, max_rel_dist)
    q_coords = jnp.arange(q_size)[:, None] * max(k_size / q_size, 1.0)
    k_coords = jnp.arange(k_size)[None, :] * max(q_size / k_size, 1.0)
    rel = q_coords - k_coords + (k_size - 1) * max(q_size / k_size, 1.0)
    return rel_pos[rel.astype(jnp.int32)]


# ---------------------------------------------------------------------------
# Full Attention.forward
# ---------------------------------------------------------------------------
def attention_forward(x, w_qkv, b_qkv, w_proj, b_proj, *, num_heads,
                      use_rel_pos=False, rel_pos_h=None, rel_pos_w=None):
    """x: (B, H, W, dim). Weights stored transposed vs. PyTorch nn.Linear."""
    B, H, W, dim = x.shape
    assert dim % num_heads == 0
    head_dim = dim // num_heads
    scale = head_dim ** (-0.5)
    S = H * W

    tq, tkv, vmem_cap = _device_config()
    s128 = _round_up(S, 128)
    tq = min(tq, s128)
    tkv = min(tkv, s128)
    tkv = max(tq, (tkv // tq) * tq)      # tq | tkv
    Sp = _round_up(S, tkv)               # tq | tkv | Sp

    # QKV projection (Pallas; bf16 MXU operands, f32 accumulation).
    qkv = linear_pallas(x.reshape(B * S, dim), w_qkv, b_qkv,
                        vmem_cap=vmem_cap)                     # (B*S, 3*dim)
    qkv = qkv.reshape(B, S, 3 * dim)

    rel_h = rel_w = eh = ew = None
    if use_rel_pos:
        # Small per-(token, head) tables; the (S, S) bias is never materialized
        # (it is expanded per kv tile inside the flash kernel).
        Rh = get_rel_pos_jax(H, H, rel_pos_h)                  # (H, H, Dh)
        Rw = get_rel_pos_jax(W, W, rel_pos_w)                  # (W, W, Dh)
        q4 = qkv[:, :, :dim].reshape(B, H, W, num_heads, head_dim)
        rel_h = jnp.einsum("bhwnc,hkc->bhwnk", q4, Rh).reshape(B, S, num_heads * H)
        rel_w = jnp.einsum("bhwnc,wkc->bhwnk", q4, Rw).reshape(B, S, num_heads * W)

    if Sp != S:
        qkv = jnp.pad(qkv, ((0, 0), (0, Sp - S), (0, 0)))
        if use_rel_pos:
            rel_h = jnp.pad(rel_h, ((0, 0), (0, Sp - S), (0, 0)))
            rel_w = jnp.pad(rel_w, ((0, 0), (0, Sp - S), (0, 0)))

    if use_rel_pos:
        cdt = jnp.bfloat16 if x.dtype == jnp.float32 else x.dtype
        key = jnp.arange(Sp)
        eh = (key[None, :] // W == jnp.arange(H)[:, None]).astype(cdt)   # (H, Sp)
        ew = (key[None, :] % W == jnp.arange(W)[:, None]).astype(cdt)    # (W, Sp)

    # Attention core (Pallas flash-style online softmax, all heads per step).
    out = flash_attention(qkv, num_heads=num_heads, head_dim=head_dim,
                          seq_len=S, scale=scale, tq=tq, tkv=tkv,
                          vmem_cap=vmem_cap, rel_h=rel_h, rel_w=rel_w,
                          eh=eh, ew=ew)                        # (B, Sp, dim)

    out = out[:, :S].reshape(B * S, dim)
    out = linear_pallas(out, w_proj, b_proj, vmem_cap=vmem_cap)
    return out.reshape(B, H, W, dim)


# ---------------------------------------------------------------------------
# Pure-JAX f32 reference (mirrors the PyTorch forward).
# ---------------------------------------------------------------------------
def _attention_reference(x, w_qkv, b_qkv, w_proj, b_proj, *, num_heads,
                         use_rel_pos=False, rel_pos_h=None, rel_pos_w=None):
    B, H, W, dim = x.shape
    hd = dim // num_heads
    scale = hd ** (-0.5)
    S = H * W
    qkv = x.reshape(B * S, dim) @ w_qkv + b_qkv[0]
    qkv = qkv.reshape(B, S, 3, num_heads, hd)
    qkv = jnp.transpose(qkv, (2, 0, 3, 1, 4)).reshape(3, B * num_heads, S, hd)
    q, k, v = qkv[0], qkv[1], qkv[2]
    attn = (q * scale) @ jnp.swapaxes(k, -2, -1)
    if use_rel_pos:
        Rh = get_rel_pos_jax(H, H, rel_pos_h)
        Rw = get_rel_pos_jax(W, W, rel_pos_w)
        r_q = q.reshape(B * num_heads, H, W, hd)
        rel_h = jnp.einsum("bhwc,hkc->bhwk", r_q, Rh)
        rel_w = jnp.einsum("bhwc,wkc->bhwk", r_q, Rw)
        bias = rel_h[:, :, :, :, None] + rel_w[:, :, :, None, :]
        attn = attn + bias.reshape(B * num_heads, S, S)
    attn = jax.nn.softmax(attn, axis=-1)
    out = attn @ v
    out = out.reshape(B, num_heads, H, W, hd)
    out = jnp.transpose(out, (0, 2, 3, 1, 4)).reshape(B * S, dim)
    out = out @ w_proj + b_proj[0]
    return out.reshape(B, H, W, dim)


if __name__ == "__main__":
    key = jax.random.PRNGKey(0)
    kx, k1, k2, k3, k4, k5, k6 = jax.random.split(key, 7)

    B, H, W = 2, 8, 8
    dim, num_heads = 128, 2
    head_dim = dim // num_heads

    x = jax.random.normal(kx, (B, H, W, dim), jnp.float32)

    bound = 1.0 / math.sqrt(dim)
    # Stored as W.T relative to PyTorch nn.Linear.
    w_qkv = jax.random.uniform(k1, (dim, 3 * dim), jnp.float32, -bound, bound)
    b_qkv = jax.random.uniform(k2, (1, 3 * dim), jnp.float32, -bound, bound)
    w_proj = jax.random.uniform(k3, (dim, dim), jnp.float32, -bound, bound)
    b_proj = jax.random.uniform(k4, (1, dim), jnp.float32, -bound, bound)
    # Non-zero rel-pos tables so the bias path is actually exercised.
    rel_pos_h = 0.02 * jax.random.normal(k5, (2 * H - 1, head_dim), jnp.float32)
    rel_pos_w = 0.02 * jax.random.normal(k6, (2 * W - 1, head_dim), jnp.float32)

    # Path 1: default constructor args (use_rel_pos=False).
    out0 = attention_forward(x, w_qkv, b_qkv, w_proj, b_proj,
                             num_heads=num_heads)
    out0 = jax.block_until_ready(out0)
    ref0 = _attention_reference(x, w_qkv, b_qkv, w_proj, b_proj,
                                num_heads=num_heads)
    assert out0.shape == (B, H, W, dim)
    err0 = float(jnp.max(jnp.abs(out0 - ref0)))
    assert err0 < 3e-2, f"no-relpos max abs err {err0}"   # bf16 MXU operands

    # Path 2: use_rel_pos=True (decomposed relative position bias).
    out1 = attention_forward(x, w_qkv, b_qkv, w_proj, b_proj,
                             num_heads=num_heads, use_rel_pos=True,
                             rel_pos_h=rel_pos_h, rel_pos_w=rel_pos_w)
    out1 = jax.block_until_ready(out1)
    ref1 = _attention_reference(x, w_qkv, b_qkv, w_proj, b_proj,
                                num_heads=num_heads, use_rel_pos=True,
                                rel_pos_h=rel_pos_h, rel_pos_w=rel_pos_w)
    err1 = float(jnp.max(jnp.abs(out1 - ref1)))
    assert err1 < 3e-2, f"relpos max abs err {err1}"

    print("KERNEL_OK")
</pallas_src>

<mosaic_0001>
module attributes {stable_mosaic.version = 11 : i64} {
  func.func @_linear_bias_kernel(%arg0: i32, %arg1: i32, %arg2: memref<128x128xf32, #tpu.memory_space<vmem>>, %arg3: memref<128x384xf32, #tpu.memory_space<vmem>>, %arg4: memref<1x384xf32, #tpu.memory_space<vmem>>, %arg5: memref<128x384xf32, #tpu.memory_space<vmem>>) attributes {dimension_semantics = [#tpu.dimension_semantics<parallel>, #tpu.dimension_semantics<parallel>], iteration_bounds = array<i64: 1, 1>, scalar_prefetch = 0 : i64, scratch_operands = 0 : i64, tpu.core_type = #tpu.core_type<tc>, window_params = [{transform_indices = @transform_0, window_bounds = array<i64: 128, 128>}, {transform_indices = @transform_1, window_bounds = array<i64: 128, 384>}, {transform_indices = @transform_2, window_bounds = array<i64: 1, 384>}, {transform_indices = @transform_3, window_bounds = array<i64: 128, 384>}]} {
    %c0 = arith.constant 0 : index
    %c0_0 = arith.constant 0 : index
    %0 = vector.load %arg2[%c0, %c0_0] : memref<128x128xf32, #tpu.memory_space<vmem>>, vector<128x128xf32>
    %1 = arith.truncf %0 : vector<128x128xf32> to vector<128x128xbf16>
    %c0_1 = arith.constant 0 : index
    %c0_2 = arith.constant 0 : index
    %2 = vector.load %arg3[%c0_1, %c0_2] : memref<128x384xf32, #tpu.memory_space<vmem>>, vector<128x384xf32>
    %3 = arith.truncf %2 : vector<128x384xf32> to vector<128x384xbf16>
    %cst = arith.constant dense<0.000000e+00> : vector<128x384xf32>
    %4 = tpu.matmul %1, %3, %cst {dimension_numbers = #tpu.dot_dimension_numbers<[1], [0], [0], [1], [0, 0, 1, 1], [], []>} : vector<128x128xbf16>, vector<128x384xbf16>, vector<128x384xf32> -> vector<128x384xf32>
    %c0_3 = arith.constant 0 : index
    %c0_4 = arith.constant 0 : index
    %5 = vector.load %arg4[%c0_3, %c0_4] : memref<1x384xf32, #tpu.memory_space<vmem>>, vector<1x384xf32>
    %6 = vector.broadcast %5 : vector<1x384xf32> to vector<128x384xf32>
    %7 = arith.addf %4, %6 : vector<128x384xf32>
    %c0_5 = arith.constant 0 : index
    %c0_6 = arith.constant 0 : index
    %8 = vector.load %arg5[%c0_5, %c0_6] : memref<128x384xf32, #tpu.memory_space<vmem>>, vector<128x384xf32>
    tpu.vector_store %arg5[%c0_5, %c0_6], %7 {strides = array<i32>} : memref<128x384xf32, #tpu.memory_space<vmem>>, vector<128x384xf32>,
    return
  }
  func.func @transform_0(%arg0: i32, %arg1: i32) -> (i32, i32) {
    %c0_i32 = arith.constant 0 : i32
    %c0_i32_0 = arith.constant 0 : i32
    return %arg0, %c0_i32 : i32, i32
  }
  func.func @transform_1(%arg0: i32, %arg1: i32) -> (i32, i32) {
    %c0_i32 = arith.constant 0 : i32
    %c0_i32_0 = arith.constant 0 : i32
    return %c0_i32, %arg1 : i32, i32
  }
  func.func @transform_2(%arg0: i32, %arg1: i32) -> (i32, i32) {
    %c0_i32 = arith.constant 0 : i32
    %c0_i32_0 = arith.constant 0 : i32
    return %c0_i32, %arg1 : i32, i32
  }
  func.func @transform_3(%arg0: i32, %arg1: i32) -> (i32, i32) {
    %c0_i32 = arith.constant 0 : i32
    return %arg0, %arg1 : i32, i32
  }
}

</mosaic_0001>

<llo_original>
// kernel: tpu_custom_call.1
$region0: #{tpu_custom_call.1}
  #allocation0 [shape = 'u32[]', space=smem, size = 0x4, offset = 0x4, fixed_abs, tag = 'smem constant byte address 0x4 - core index']
  #allocation1 [shape = 'u32[144,128]{1,0:T(1,128)}', space=vmem, size = 0x12000, scoped, tag = 'internal scratch']
  %s0 = inlined_call_operand.hbm [shape: f32[128,128], index: 0, kind: input, shape index: {}]
  %s1 = inlined_call_operand.hbm [shape: f32[128,384], index: 1, kind: input, shape index: {}]
  %s2 = inlined_call_operand.vmem [shape: f32[1,384], index: 2, kind: input, shape index: {}]
  %s3 = inlined_call_operand.hbm [shape: f32[128,384], index: 3, kind: output, shape index: {}]
  %s4 = sld [smem:[#allocation0]]
  $region30: #{tpu_custom_call.1} parent=0
    _
  %s6 = ssub.s32 1, %s4
  %s7 = scalar_select 0, %s6, %s4
  $region1: #{tpu_custom_call.1} parent=0
    #allocation2 [shape = 'u8[65536]{0}', space=vmem, size = 0x10000, scoped, tag = 'input window, operand 0, single buffered']
    #allocation3 [shape = 's32[1]{0}', space=sflag, size = 0x4, scoped, tag = 'scoped memory for tpu_custom_call.1']
    #allocation4 [shape = 's32[1]{0}', space=sflag, size = 0x4, scoped, tag = 'scoped memory for tpu_custom_call.1']
    #allocation5 [shape = 'u8[196608]{0}', space=vmem, size = 0x30000, scoped, tag = 'input window, operand 1, single buffered']
    #allocation6 [shape = 's32[1]{0}', space=sflag, size = 0x4, scoped, tag = 'scoped memory for tpu_custom_call.1']
    #allocation7 [shape = 'u8[196608]{0}', space=vmem, size = 0x30000, scoped, tag = 'output window, operand 0, single buffered']
    %8 = vsyncpa [#allocation3], 0
    %9 = vsyncpa [#allocation6], 0
    %10 = vsyncpa [#allocation4], 0
    // Predicated region
    $region2: #{tpu_custom_call.1} parent=1 // pred_check
      _
    $region3: #{tpu_custom_call.1} parent=1 // pred_check_branch
      %12 = sbr.rel (0) target = $region5
    $region4: #{tpu_custom_call.1} parent=1 // pred_region
      %s14 = ssub.s32 2048, 2048
      %15 = vsyncadd [#allocation3], %s14
      %s16 = sshll.u32 [#allocation2], 4
      %s17 = int_to_ptr.vmem [resolvable:$true] %s16
      %22 = dma.hbm_to_vmem [thread:$0]  %s0, 2048, %s17, [#allocation3], 128, 128, 8
    $region5: #{tpu_custom_call.1} parent=1 // pred_fallthru
      _
    // Predicated region
    $region6: #{tpu_custom_call.1} parent=1 // pred_check
      _
    $region7: #{tpu_custom_call.1} parent=1 // pred_check_branch
      %24 = sbr.rel (0) target = $region9
    $region8: #{tpu_custom_call.1} parent=1 // pred_region
      %s26 = ssub.s32 6144, 6144
      %27 = vsyncadd [#allocation6], %s26
      %s28 = sshll.u32 [#allocation5], 4
      %s29 = int_to_ptr.vmem [resolvable:$true] %s28
      %34 = dma.hbm_to_vmem [thread:$0]  %s1, 6144, %s29, [#allocation6], 384, 384, 24
    $region9: #{tpu_custom_call.1} parent=1 // pred_fallthru
      _
    // Predicated region
    $region10: #{tpu_custom_call.1} parent=1 // pred_check
      _
    $region11: #{tpu_custom_call.1} parent=1 // pred_check_branch
      %36 = sbr.rel (0) target = $region13
    $region12: #{tpu_custom_call.1} parent=1 // pred_region
      _
    $region13: #{tpu_custom_call.1} parent=1 // pred_fallthru
      _
    // Predicated region
    $region14: #{tpu_custom_call.1} parent=1 // pred_check
      _
    $region15: #{tpu_custom_call.1} parent=1 // pred_check_branch
      %38 = sbr.rel (0) target = $region17
    $region16: #{tpu_custom_call.1} parent=1 // pred_region
      %39 = dma.done [#allocation3], 2048
    $region17: #{tpu_custom_call.1} parent=1 // pred_fallthru
      _
    // Predicated region
    $region18: #{tpu_custom_call.1} parent=1 // pred_check
      _
    $region19: #{tpu_custom_call.1} parent=1 // pred_check_branch
      %41 = sbr.rel (0) target = $region21
    $region20: #{tpu_custom_call.1} parent=1 // pred_region
      %42 = dma.done [#allocation6], 6144
    $region21: #{tpu_custom_call.1} parent=1 // pred_fallthru
      _
    %v44 = vld [vmem:[#allocation2] sm:$0xff]
    %v45 = vld [vmem:[#allocation2 + $0x8] sm:$0xff]
    %v46 = vld [vmem:[#allocation2 + $0x10] sm:$0xff]
    %v47 = vld [vmem:[#allocation2 + $0x18] sm:$0xff]
    %v48 = vld [vmem:[#allocation2 + $0x20] sm:$0xff]
    %v49 = vld [vmem:[#allocation2 + $0x28] sm:$0xff]
    %v50 = vld [vmem:[#allocation2 + $0x30] sm:$0xff]
    %v51 = vld [vmem:[#allocation2 + $0x38] sm:$0xff]
    %v52 = vld [vmem:[#allocation2 + $0x40] sm:$0xff]
    %v53 = vld [vmem:[#allocation2 + $0x48] sm:$0xff]
    %v54 = vld [vmem:[#allocation2 + $0x50] sm:$0xff]
    %v55 = vld [vmem:[#allocation2 + $0x58] sm:$0xff]
    %v56 = vld [vmem:[#allocation2 + $0x60] sm:$0xff]
    %v57 = vld [vmem:[#allocation2 + $0x68] sm:$0xff]
    %v58 = vld [vmem:[#allocation2 + $0x70] sm:$0xff]
    %v59 = vld [vmem:[#allocation2 + $0x78] sm:$0xff]
    %v60 = vpack.c.bf16 %v45, %v44
    %v61 = vpack.c.bf16 %v47, %v46
    %v62 = vpack.c.bf16 %v49, %v48
    %v63 = vpack.c.bf16 %v51, %v50
    %v64 = vpack.c.bf16 %v53, %v52
    %v65 = vpack.c.bf16 %v55, %v54
    %v66 = vpack.c.bf16 %v57, %v56
    %v67 = vpack.c.bf16 %v59, %v58
    %v68 = vld [vmem:[#allocation5] sm:$0xff]
    %v69 = vld [vmem:[#allocation5 + $0x8] sm:$0xff]
    %v70 = vld [vmem:[#allocation5 + $0x10] sm:$0xff]
    %v71 = vld [vmem:[#allocation5 + $0x18] sm:$0xff]
    %v72 = vld [vmem:[#allocation5 + $0x20] sm:$0xff]
    %v73 = vld [vmem:[#allocation5 + $0x28] sm:$0xff]
    %v74 = vld [vmem:[#allocation5 + $0x30] sm:$0xff]
    %v75 = vld [vmem:[#allocation5 + $0x38] sm:$0xff]
    %v76 = vld [vmem:[#allocation5 + $0x40] sm:$0xff]
    %v77 = vld [vmem:[#allocation5 + $0x48] sm:$0xff]
    %v78 = vld [vmem:[#allocation5 + $0x50] sm:$0xff]
    %v79 = vld [vmem:[#allocation5 + $0x58] sm:$0xff]
    %v80 = vld [vmem:[#allocation5 + $0x60] sm:$0xff]
    %v81 = vld [vmem:[#allocation5 + $0x68] sm:$0xff]
    %v82 = vld [vmem:[#allocation5 + $0x70] sm:$0xff]
    %v83 = vld [vmem:[#allocation5 + $0x78] sm:$0xff]
    %v84 = vld [vmem:[#allocation5 + $0x80] sm:$0xff]
    %v85 = vld [vmem:[#allocation5 + $0x88] sm:$0xff]
    %v86 = vld [vmem:[#allocation5 + $0x90] sm:$0xff]
    %v87 = vld [vmem:[#allocation5 + $0x98] sm:$0xff]
    %v88 = vld [vmem:[#allocation5 + $0xa0] sm:$0xff]
    %v89 = vld [vmem:[#allocation5 + $0xa8] sm:$0xff]
    %v90 = vld [vmem:[#allocation5 + $0xb0] sm:$0xff]
    %v91 = vld [vmem:[#allocation5 + $0xb8] sm:$0xff]
    %v92 = vld [vmem:[#allocation5 + $0xc0] sm:$0xff]
    %v93 = vld [vmem:[#allocation5 + $0xc8] sm:$0xff]
    %v94 = vld [vmem:[#allocation5 + $0xd0] sm:$0xff]
    %v95 = vld [vmem:[#allocation5 + $0xd8] sm:$0xff]
    %v96 = vld [vmem:[#allocation5 + $0xe0] sm:$0xff]
    %v97 = vld [vmem:[#allocation5 + $0xe8] sm:$0xff]
    %v98 = vld [vmem:[#allocation5 + $0xf0] sm:$0xff]
    %v99 = vld [vmem:[#allocation5 + $0xf8] sm:$0xff]
    %v100 = vld [vmem:[#allocation5 + $0x100] sm:$0xff]
    %v101 = vld [vmem:[#allocation5 + $0x108] sm:$0xff]
    %v102 = vld [vmem:[#allocation5 + $0x110] sm:$0xff]
    %v103 = vld [vmem:[#allocation5 + $0x118] sm:$0xff]
    %v104 = vld [vmem:[#allocation5 + $0x120] sm:$0xff]
    %v105 = vld [vmem:[#allocation5 + $0x128] sm:$0xff]
    %v106 = vld [vmem:[#allocation5 + $0x130] sm:$0xff]
    %v107 = vld [vmem:[#allocation5 + $0x138] sm:$0xff]
    %v108 = vld [vmem:[#allocation5 + $0x140] sm:$0xff]
    %v109 = vld [vmem:[#allocation5 + $0x148] sm:$0xff]
    %v110 = vld [vmem:[#allocation5 + $0x150] sm:$0xff]
    %v111 = vld [vmem:[#allocation5 + $0x158] sm:$0xff]
    %v112 = vld [vmem:[#allocation5 + $0x160] sm:$0xff]
    %v113 = vld [vmem:[#allocation5 + $0x168] sm:$0xff]
    %v114 = vld [vmem:[#allocation5 + $0x170] sm:$0xff]
    %v115 = vld [vmem:[#allocation5 + $0x178] sm:$0xff]
    %v116 = vpack.c.bf16 %v71, %v68
    %v117 = vpack.c.bf16 %v72, %v69
    %v118 = vpack.c.bf16 %v73, %v70
    %v119 = vpack.c.bf16 %v77, %v74
    %v120 = vpack.c.bf16 %v78, %v75
    %v121 = vpack.c.bf16 %v79, %v76
    %v122 = vpack.c.bf16 %v83, %v80
    %v123 = vpack.c.bf16 %v84, %v81
    %v124 = vpack.c.bf16 %v85, %v82
    %v125 = vpack.c.bf16 %v89, %v86
    %v126 = vpack.c.bf16 %v90, %v87
    %v127 = vpack.c.bf16 %v91, %v88
    %v128 = vpack.c.bf16 %v95, %v92
    %v129 = vpack.c.bf16 %v96, %v93
    %v130 = vpack.c.bf16 %v97, %v94
    %v131 = vpack.c.bf16 %v101, %v98
    %v132 = vpack.c.bf16 %v102, %v99
    %v133 = vpack.c.bf16 %v103, %v100
    %v134 = vpack.c.bf16 %v107, %v104
    %v135 = vpack.c.bf16 %v108, %v105
    %v136 = vpack.c.bf16 %v109, %v106
    %v137 = vpack.c.bf16 %v113, %v110
    %v138 = vpack.c.bf16 %v114, %v111
    %v139 = vpack.c.bf16 %v115, %v112
    %v140 = vld [vmem:[%s2] sm:$0x7]
    %v142 = vlaneseq
    %v143 = vshrl.u32 %v142, 7
    %v144 = vsub.s32 0, %v143
    %v145 = vrot.slane %v140, %v144
    %v146 = vlaneseq
    %v147 = vshrl.u32 %v146, 7
    %v148 = vsub.s32 1, %v147
    %v149 = vrot.slane %v140, %v148
    %v150 = vlaneseq
    %v151 = vshrl.u32 %v150, 7
    %v152 = vsub.s32 2, %v151
    %v153 = vrot.slane %v140, %v152
    %157 = vmatprep.subr.bf16.mxu0 %v117
    %158 = vmatpush1.bf16.msra.mxu0 %v116
    %159 = vmatprep.subr.bf16.mxu0 %v120
    %160 = vmatpush1.bf16.msra.mxu0 %v119
    %161 = vmatprep.subr.bf16.mxu0 %v123
    %162 = vmatpush1.bf16.msra.mxu0 %v122
    %163 = vmatprep.subr.bf16.mxu0 %v126
    %164 = vmatpush1.bf16.msra.mxu0 %v125
    %165 = vmatprep.subr.bf16.mxu0 %v129
    %166 = vmatpush1.bf16.msra.mxu0 %v128
    %167 = vmatprep.subr.bf16.mxu0 %v132
    %168 = vmatpush1.bf16.msra.mxu0 %v131
    %169 = vmatprep.subr.bf16.mxu0 %v135
    %170 = vmatpush1.bf16.msra.mxu0 %v134
    %171 = vmatprep.subr.bf16.mxu0 %v138
    %172 = vmatpush1.bf16.msra.mxu0 %v137
    %173 = vmatprep.subr.bf16.mxu0 0
    %174 = vmatpush1.bf16.msra.mxu0 0
    %175 = vmatprep.subr.bf16.mxu0 0
    %176 = vmatpush1.bf16.msra.mxu0 0
    %177 = vmatprep.subr.bf16.mxu0 0
    %178 = vmatpush1.bf16.msra.mxu0 0
    %179 = vmatprep.subr.bf16.mxu0 0
    %180 = vmatpush1.bf16.msra.mxu0 0
    %181 = vmatprep.subr.bf16.mxu0 0
    %182 = vmatpush1.bf16.msra.mxu0 0
    %183 = vmatprep.subr.bf16.mxu0 0
    %184 = vmatpush1.bf16.msra.mxu0 0
    %185 = vmatprep.subr.bf16.mxu0 0
    %186 = vmatpush1.bf16.msra.mxu0 0
    %187 = vmatprep.subr.bf16.mxu0 0
    %188 = vmatpush1.bf16.msra.mxu0 0
    %189 = vmatprep.mubr.bf16.mxu0 0
    %190 = vmatmul.mubr.bf16.gmra.mrb[0].mxu0 %v60
    %v191 = vpop.f32.mrb[0].mxu0
    %v192 = vadd.f32 %v145, %v191
    %v193 = vpop.f32.mrb[0].mxu0
    %v194 = vadd.f32 %v149, %v193
    %v195 = vpop.f32.mrb[0].mxu0
    %v196 = vadd.f32 %v145, %v195
    %v197 = vpop.f32.mrb[0].mxu0
    %v198 = vadd.f32 %v149, %v197
    %199 = vmatprep.mubr.bf16.mxu0 0
    %200 = vmatmul.mubr.bf16.gmra.mrb[0].mxu0 %v61
    %v201 = vpop.f32.mrb[0].mxu0
    %v202 = vadd.f32 %v145, %v201
    %v203 = vpop.f32.mrb[0].mxu0
    %v204 = vadd.f32 %v149, %v203
    %v205 = vpop.f32.mrb[0].mxu0
    %v206 = vadd.f32 %v145, %v205
    %v207 = vpop.f32.mrb[0].mxu0
    %v208 = vadd.f32 %v149, %v207
    %209 = vmatprep.mubr.bf16.mxu0 0
    %210 = vmatmul.mubr.bf16.gmra.mrb[0].mxu0 %v62
    %v211 = vpop.f32.mrb[0].mxu0
    %v212 = vadd.f32 %v145, %v211
    %v213 = vpop.f32.mrb[0].mxu0
    %v214 = vadd.f32 %v149, %v213
    %v215 = vpop.f32.mrb[0].mxu0
    %v216 = vadd.f32 %v145, %v215
    %v217 = vpop.f32.mrb[0].mxu0
    %v218 = vadd.f32 %v149, %v217
    %219 = vmatprep.mubr.bf16.mxu0 0
    %220 = vmatmul.mubr.bf16.gmra.mrb[0].mxu0 %v63
    %v221 = vpop.f32.mrb[0].mxu0
    %v222 = vadd.f32 %v145, %v221
    %v223 = vpop.f32.mrb[0].mxu0
    %v224 = vadd.f32 %v149, %v223
    %v225 = vpop.f32.mrb[0].mxu0
    %v226 = vadd.f32 %v145, %v225
    %v227 = vpop.f32.mrb[0].mxu0
    %v228 = vadd.f32 %v149, %v227
    %229 = vmatprep.mubr.bf16.mxu0 0
    %230 = vmatmul.mubr.bf16.gmra.mrb[0].mxu0 %v64
    %v231 = vpop.f32.mrb[0].mxu0
    %v232 = vadd.f32 %v145, %v231
    %v233 = vpop.f32.mrb[0].mxu0
    %v234 = vadd.f32 %v149, %v233
    %v235 = vpop.f32.mrb[0].mxu0
    %v236 = vadd.f32 %v145, %v235
    %v237 = vpop.f32.mrb[0].mxu0
    %v238 = vadd.f32 %v149, %v237
    %239 = vmatprep.mubr.bf16.mxu0 0
    %240 = vmatmul.mubr.bf16.gmra.mrb[0].mxu0 %v65
    %v241 = vpop.f32.mrb[0].mxu0
    %v242 = vadd.f32 %v145, %v241
    %v243 = vpop.f32.mrb[0].mxu0
    %v244 = vadd.f32 %v149, %v243
    %v245 = vpop.f32.mrb[0].mxu0
    %v246 = vadd.f32 %v145, %v245
    %v247 = vpop.f32.mrb[0].mxu0
    %v248 = vadd.f32 %v149, %v247
    %249 = vmatprep.mubr.bf16.mxu0 0
    %250 = vmatmul.mubr.bf16.gmra.mrb[0].mxu0 %v66
    %v251 = vpop.f32.mrb[0].mxu0
    %v252 = vadd.f32 %v145, %v251
    %v253 = vpop.f32.mrb[0].mxu0
    %v254 = vadd.f32 %v149, %v253
    %v255 = vpop.f32.mrb[0].mxu0
    %v256 = vadd.f32 %v145, %v255
    %v257 = vpop.f32.mrb[0].mxu0
    %v258 = vadd.f32 %v149, %v257
    %259 = vmatprep.mubr.bf16.mxu0 0
    %260 = vmatmul.mubr.bf16.gmra.mrb[0].mxu0 %v67
    %v261 = vpop.f32.mrb[0].mxu0
    %v262 = vadd.f32 %v145, %v261
    %v263 = vpop.f32.mrb[0].mxu0
    %v264 = vadd.f32 %v149, %v263
    %v265 = vpop.f32.mrb[0].mxu0
    %v266 = vadd.f32 %v145, %v265
    %v267 = vpop.f32.mrb[0].mxu0
    %v268 = vadd.f32 %v149, %v267
    %269 = vdwg.mxu0
    %270 = vmatprep.subr.bf16.mxu0 0
    %271 = vmatpush1.bf16.msra.mxu0 %v118
    %272 = vmatprep.subr.bf16.mxu0 0
    %273 = vmatpush1.bf16.msra.mxu0 %v121
    %274 = vmatprep.subr.bf16.mxu0 0
    %275 = vmatpush1.bf16.msra.mxu0 %v124
    %276 = vmatprep.subr.bf16.mxu0 0
    %277 = vmatpush1.bf16.msra.mxu0 %v127
    %278 = vmatprep.subr.bf16.mxu0 0
    %279 = vmatpush1.bf16.msra.mxu0 %v130
    %280 = vmatprep.subr.bf16.mxu0 0
    %281 = vmatpush1.bf16.msra.mxu0 %v133
    %282 = vmatprep.subr.bf16.mxu0 0
    %283 = vmatpush1.bf16.msra.mxu0 %v136
    %284 = vmatprep.subr.bf16.mxu0 0
    %285 = vmatpush1.bf16.msra.mxu0 %v139
    %286 = vmatprep.subr.bf16.mxu0 0
    %287 = vmatpush1.bf16.msra.mxu0 0
    %288 = vmatprep.subr.bf16.mxu0 0
    %289 = vmatpush1.bf16.msra.mxu0 0
    %290 = vmatprep.subr.bf16.mxu0 0
    %291 = vmatpush1.bf16.msra.mxu0 0
    %292 = vmatprep.subr.bf16.mxu0 0
    %293 = vmatpush1.bf16.msra.mxu0 0
    %294 = vmatprep.subr.bf16.mxu0 0
    %295 = vmatpush1.bf16.msra.mxu0 0
    %296 = vmatprep.subr.bf16.mxu0 0
    %297 = vmatpush1.bf16.msra.mxu0 0
    %298 = vmatprep.subr.bf16.mxu0 0
    %299 = vmatpush1.bf16.msra.mxu0 0
    %300 = vmatprep.subr.bf16.mxu0 0
    %301 = vmatpush1.bf16.msra.mxu0 0
    %302 = vmatprep.mubr.bf16.mxu0 0
    %303 = vmatmul.mubr.bf16.gmra.mrb[0].mxu0 %v60
    %v304 = vpop.f32.mrb[0].mxu0
    %v305 = vadd.f32 %v153, %v304
    %v306 = vpop.f32.mrb[0].mxu0
    %v307 = vpop.f32.mrb[0].mxu0
    %v308 = vadd.f32 %v153, %v307
    %v309 = vpop.f32.mrb[0].mxu0
    %310 = vmatprep.mubr.bf16.mxu0 0
    %311 = vmatmul.mubr.bf16.gmra.mrb[0].mxu0 %v61
    %v312 = vpop.f32.mrb[0].mxu0
    %v313 = vadd.f32 %v153, %v312
    %v314 = vpop.f32.mrb[0].mxu0
    %v315 = vpop.f32.mrb[0].mxu0
    %v316 = vadd.f32 %v153, %v315
    %v317 = vpop.f32.mrb[0].mxu0
    %318 = vmatprep.mubr.bf16.mxu0 0
    %319 = vmatmul.mubr.bf16.gmra.mrb[0].mxu0 %v62
    %v320 = vpop.f32.mrb[0].mxu0
    %v321 = vadd.f32 %v153, %v320
    %v322 = vpop.f32.mrb[0].mxu0
    %v323 = vpop.f32.mrb[0].mxu0
    %v324 = vadd.f32 %v153, %v323
    %v325 = vpop.f32.mrb[0].mxu0
    %326 = vmatprep.mubr.bf16.mxu0 0
    %327 = vmatmul.mubr.bf16.gmra.mrb[0].mxu0 %v63
    %v328 = vpop.f32.mrb[0].mxu0
    %v329 = vadd.f32 %v153, %v328
    %v330 = vpop.f32.mrb[0].mxu0
    %v331 = vpop.f32.mrb[0].mxu0
    %v332 = vadd.f32 %v153, %v331
    %v333 = vpop.f32.mrb[0].mxu0
    %334 = vmatprep.mubr.bf16.mxu0 0
    %335 = vmatmul.mubr.bf16.gmra.mrb[0].mxu0 %v64
    %v336 = vpop.f32.mrb[0].mxu0
    %v337 = vadd.f32 %v153, %v336
    %v338 = vpop.f32.mrb[0].mxu0
    %v339 = vpop.f32.mrb[0].mxu0
    %v340 = vadd.f32 %v153, %v339
    %v341 = vpop.f32.mrb[0].mxu0
    %342 = vmatprep.mubr.bf16.mxu0 0
    %343 = vmatmul.mubr.bf16.gmra.mrb[0].mxu0 %v65
    %v344 = vpop.f32.mrb[0].mxu0
    %v345 = vadd.f32 %v153, %v344
    %v346 = vpop.f32.mrb[0].mxu0
    %v347 = vpop.f32.mrb[0].mxu0
    %v348 = vadd.f32 %v153, %v347
    %v349 = vpop.f32.mrb[0].mxu0
    %350 = vmatprep.mubr.bf16.mxu0 0
    %351 = vmatmul.mubr.bf16.gmra.mrb[0].mxu0 %v66
    %v352 = vpop.f32.mrb[0].mxu0
    %v353 = vadd.f32 %v153, %v352
    %v354 = vpop.f32.mrb[0].mxu0
    %v355 = vpop.f32.mrb[0].mxu0
    %v356 = vadd.f32 %v153, %v355
    %v357 = vpop.f32.mrb[0].mxu0
    %358 = vmatprep.mubr.bf16.mxu0 0
    %359 = vmatmul.mubr.bf16.gmra.mrb[0].mxu0 %v67
    %v360 = vpop.f32.mrb[0].mxu0
    %v361 = vadd.f32 %v153, %v360
    %v362 = vpop.f32.mrb[0].mxu0
    %v363 = vpop.f32.mrb[0].mxu0
    %v364 = vadd.f32 %v153, %v363
    %v365 = vpop.f32.mrb[0].mxu0
    %366 = vdwg.mxu0
    %367 = vst [vmem:[#allocation7] sm:$0xff] %v192
    %368 = vst [vmem:[#allocation7 + $0x8] sm:$0xff] %v194
    %369 = vst [vmem:[#allocation7 + $0x10] sm:$0xff] %v305
    %370 = vst [vmem:[#allocation7 + $0x18] sm:$0xff] %v196
    %371 = vst [vmem:[#allocation7 + $0x20] sm:$0xff] %v198
    %372 = vst [vmem:[#allocation7 + $0x28] sm:$0xff] %v308
    %373 = vst [vmem:[#allocation7 + $0x30] sm:$0xff] %v202
    %374 = vst [vmem:[#allocation7 + $0x38] sm:$0xff] %v204
    %375 = vst [vmem:[#allocation7 + $0x40] sm:$0xff] %v313
    %376 = vst [vmem:[#allocation7 + $0x48] sm:$0xff] %v206
    %377 = vst [vmem:[#allocation7 + $0x50] sm:$0xff] %v208
    %378 = vst [vmem:[#allocation7 + $0x58] sm:$0xff] %v316
    %379 = vst [vmem:[#allocation7 + $0x60] sm:$0xff] %v212
    %380 = vst [vmem:[#allocation7 + $0x68] sm:$0xff] %v214
    %381 = vst [vmem:[#allocation7 + $0x70] sm:$0xff] %v321
    %382 = vst [vmem:[#allocation7 + $0x78] sm:$0xff] %v216
    %383 = vst [vmem:[#allocation7 + $0x80] sm:$0xff] %v218
    %384 = vst [vmem:[#allocation7 + $0x88] sm:$0xff] %v324
    %385 = vst [vmem:[#allocation7 + $0x90] sm:$0xff] %v222
    %386 = vst [vmem:[#allocation7 + $0x98] sm:$0xff] %v224
    %387 = vst [vmem:[#allocation7 + $0xa0] sm:$0xff] %v329
    %388 = vst [vmem:[#allocation7 + $0xa8] sm:$0xff] %v226
    %389 = vst [vmem:[#allocation7 + $0xb0] sm:$0xff] %v228
    %390 = vst [vmem:[#allocation7 + $0xb8] sm:$0xff] %v332
    %391 = vst [vmem:[#allocation7 + $0xc0] sm:$0xff] %v232
    %392 = vst [vmem:[#allocation7 + $0xc8] sm:$0xff] %v234
    %393 = vst [vmem:[#allocation7 + $0xd0] sm:$0xff] %v337
    %394 = vst [vmem:[#allocation7 + $0xd8] sm:$0xff] %v236
    %395 = vst [vmem:[#allocation7 + $0xe0] sm:$0xff] %v238
    %396 = vst [vmem:[#allocation7 + $0xe8] sm:$0xff] %v340
    %397 = vst [vmem:[#allocation7 + $0xf0] sm:$0xff] %v242
    %398 = vst [vmem:[#allocation7 + $0xf8] sm:$0xff] %v244
    %399 = vst [vmem:[#allocation7 + $0x100] sm:$0xff] %v345
    %400 = vst [vmem:[#allocation7 + $0x108] sm:$0xff] %v246
    %401 = vst [vmem:[#allocation7 + $0x110] sm:$0xff] %v248
    %402 = vst [vmem:[#allocation7 + $0x118] sm:$0xff] %v348
    %403 = vst [vmem:[#allocation7 + $0x120] sm:$0xff] %v252
    %404 = vst [vmem:[#allocation7 + $0x128] sm:$0xff] %v254
    %405 = vst [vmem:[#allocation7 + $0x130] sm:$0xff] %v353
    %406 = vst [vmem:[#allocation7 + $0x138] sm:$0xff] %v256
    %407 = vst [vmem:[#allocation7 + $0x140] sm:$0xff] %v258
    %408 = vst [vmem:[#allocation7 + $0x148] sm:$0xff] %v356
    %409 = vst [vmem:[#allocation7 + $0x150] sm:$0xff] %v262
    %410 = vst [vmem:[#allocation7 + $0x158] sm:$0xff] %v264
    %411 = vst [vmem:[#allocation7 + $0x160] sm:$0xff] %v361
    %412 = vst [vmem:[#allocation7 + $0x168] sm:$0xff] %v266
    %413 = vst [vmem:[#allocation7 + $0x170] sm:$0xff] %v268
    %414 = vst [vmem:[#allocation7 + $0x178] sm:$0xff] %v364
    // Predicated region
    $region22: #{tpu_custom_call.1} parent=1 // pred_check
      _
    $region23: #{tpu_custom_call.1} parent=1 // pred_check_branch
      %416 = sbr.rel (0) target = $region25
    $region24: #{tpu_custom_call.1} parent=1 // pred_region
      %s418 = ssub.s32 6144, 6144
      %419 = vsyncadd [#allocation4], %s418
      %s420 = sshll.u32 [#allocation7], 4
      %s421 = int_to_ptr.vmem [resolvable:$true] %s420
      %426 = dma.vmem_to_hbm [thread:$0]  %s421, 6144, %s3, [#allocation4], 384, 384, 24
    $region25: #{tpu_custom_call.1} parent=1 // pred_fallthru
      _
    // Predicated region
    $region26: #{tpu_custom_call.1} parent=1 // pred_check
      _
    $region27: #{tpu_custom_call.1} parent=1 // pred_check_branch
      %428 = sbr.rel (0) target = $region29
    $region28: #{tpu_custom_call.1} parent=1 // pred_region
      %429 = dma.done [#allocation4], 6144
    $region29: #{tpu_custom_call.1} parent=1 // pred_fallthru
      _
    %430 = vsyncpa [#allocation3], 1
    %431 = vsyncpa [#allocation6], 1
    %432 = vsyncpa [#allocation4], 1

</llo_original>
